<compile_context>
chip_gen: v7x
topology: tpu7x:2x2x1
jax: 0.10.0
libtpu: 0.0.40
codegen_flags: <defaults>
</compile_context>

<pallas_src>
import functools

import jax
import jax.numpy as jnp
from jax.experimental import pallas as pl
from jax.experimental.pallas import tpu as pltpu


# ---------------------------------------------------------------------------
# Device / tiling heuristics
# ---------------------------------------------------------------------------

def _device_params():
    """Returns (tile_budget_bytes, vmem_limit_bytes, small_vmem, num_cores)."""
    kind = ""
    try:
        kind = jax.devices()[0].device_kind.lower()
    except Exception:
        pass
    phys = None
    try:
        info = pltpu.get_tpu_info()
        phys = getattr(info, "vmem_capacity_bytes", None)
    except Exception:
        phys = None
    if phys is None:
        # Default to the 128 MiB generations (v2..v6e); only v7x has 64 MiB.
        phys = (64 << 20) if "v7" in kind else (128 << 20)
    small_vmem = phys < (128 << 20)
    num_cores = 2 if ("v7" in kind or small_vmem) else 1
    if small_vmem:            # v7x-class: 64 MiB physical
        return 24 << 20, 48 << 20, True, num_cores
    return 48 << 20, 96 << 20, False, num_cores   # v5e / v6e: 128 MiB physical


def _pick_tk(dim_in, tk_cap):
    """Largest lane-aligned tk <= cap that divides dim_in, else cap (mask tail)."""
    if dim_in <= tk_cap:
        return dim_in
    for step in (256, 128):
        t = (tk_cap // step) * step
        while t >= step:
            if dim_in % t == 0:
                return t
            t -= step
    return tk_cap   # no aligned divisor: the kernel masks the K tail


def _choose_tiles(m, dim_in, dim_out, in_itemsize, out_itemsize, budget, small_vmem):
    """VMEM-budgeted, alignment-respecting default tiles."""
    # v5e/v6e (128 MiB): bigger tm cuts weight re-streaming (dominant HBM term).
    # v7x (64 MiB): keep tm modest, shrink tn before tm in the budget loop.
    tm_cap = 512 if small_vmem else 1024
    tn_cap = 1024 if small_vmem else 2048
    tk_cap = 1024 if small_vmem else 2048

    tm = m if m <= tm_cap else tm_cap
    tn = dim_out if dim_out <= tn_cap else tn_cap     # lane-dense output tile
    tk = _pick_tk(dim_in, tk_cap)

    needs_acc = out_itemsize < 4    # f32 scratch only for sub-f32 outputs

    def vmem_use(tm_, tn_, tk_):
        # double-buffered inputs + double-buffered output (+ f32 acc if needed)
        use = 2 * (tm_ * tk_ + tk_ * tn_) * in_itemsize + 2 * tm_ * tn_ * out_itemsize
        if needs_acc:
            use += tm_ * tn_ * 4
        return use

    while vmem_use(tm, tn, tk) > budget:
        if tk > 512 and tk % 256 == 0:
            tk //= 2
        elif tn > 512 and tn % 256 == 0:
            tn //= 2
        elif tm > 256 and tm % 16 == 0:
            tm //= 2
        else:
            break
    return tm, tn, tk


# ---------------------------------------------------------------------------
# Kernels
# ---------------------------------------------------------------------------

def _mask_k_tail(x, w, k, k_total, tk):
    """Zero the out-of-range K columns/rows on the (possibly partial) K step."""
    valid = k_total - k * tk
    xcol = jax.lax.broadcasted_iota(jnp.int32, x.shape, 1)
    wrow = jax.lax.broadcasted_iota(jnp.int32, w.shape, 0)
    x = jnp.where(xcol < valid, x, jnp.zeros_like(x))
    w = jnp.where(wrow < valid, w, jnp.zeros_like(w))
    return x, w


def _single_k_kernel(x_ref, w_ref, o_ref):
    # Whole reduction in one K block: no init / scratch / final copy.
    o_ref[...] = jnp.dot(
        x_ref[...], w_ref[...], preferred_element_type=jnp.float32
    ).astype(o_ref.dtype)


def _multi_k_out_acc_kernel(x_ref, w_ref, o_ref, *, k_total, tk, needs_mask):
    # f32 output: accumulate directly into the resident output tile (its
    # index_map ignores k) — no f32 scratch, no final copy.
    k = pl.program_id(2)

    @pl.when(k == 0)
    def _():
        o_ref[...] = jnp.zeros_like(o_ref)

    x = x_ref[...]
    w = w_ref[...]
    if needs_mask:
        x, w = _mask_k_tail(x, w, k, k_total, tk)
    o_ref[...] += jnp.dot(x, w, preferred_element_type=jnp.float32)


def _multi_k_scratch_kernel(x_ref, w_ref, o_ref, acc_ref, *, k_total, tk, needs_mask):
    # Sub-f32 output: keep an f32 accumulator, cast once on the last K step.
    k = pl.program_id(2)

    @pl.when(k == 0)
    def _():
        acc_ref[...] = jnp.zeros_like(acc_ref)

    x = x_ref[...]
    w = w_ref[...]
    if needs_mask:
        x, w = _mask_k_tail(x, w, k, k_total, tk)
    acc_ref[...] += jnp.dot(x, w, preferred_element_type=jnp.float32)

    @pl.when(k == pl.num_programs(2) - 1)
    def _():
        o_ref[...] = acc_ref[...].astype(o_ref.dtype)


# ---------------------------------------------------------------------------
# Wrapper
# ---------------------------------------------------------------------------

def prepare_weight(weight):
    """One-time canonicalization of a PyTorch nn.Linear weight (dim_out, dim_in)
    to the MXU-native (dim_in, dim_out) layout. Do this at init, not per call."""
    return jnp.asarray(weight).T


def linear_no_bias(x, weight_t, *, tm=None, tn=None, tk=None):
    """y = x @ weight_t, weight_t in (dim_in, dim_out) layout (see prepare_weight)."""
    dim_in, dim_out = weight_t.shape
    assert x.shape[-1] == dim_in, "x last dim must equal dim_in"

    orig_shape = x.shape
    m = 1
    for d in orig_shape[:-1]:
        m *= d
    x2d = x.reshape(m, dim_in)

    out_dtype = x.dtype
    in_itemsize = jnp.dtype(x.dtype).itemsize
    out_itemsize = jnp.dtype(out_dtype).itemsize

    budget, vmem_limit, small_vmem, num_cores = _device_params()
    tm_d, tn_d, tk_d = _choose_tiles(
        m, dim_in, dim_out, in_itemsize, out_itemsize, budget, small_vmem)
    tm = tm_d if tm is None else min(tm, m)
    tn = tn_d if tn is None else min(tn, dim_out)
    tk = tk_d if tk is None else min(tk, dim_in)

    # v7x megacore: guarantee >= 2 parallel output tiles (one per TensorCore),
    # without breaking the (8, 128)-or-full-dim block constraint.
    if num_cores > 1 and pl.cdiv(m, tm) * pl.cdiv(dim_out, tn) < num_cores:
        if tn >= 256 and tn % 256 == 0:
            tn //= 2
        elif tm >= 16 and tm % 16 == 0:
            tm //= 2

    k_steps = pl.cdiv(dim_in, tk)
    needs_mask = (dim_in % tk) != 0
    grid = (pl.cdiv(m, tm), pl.cdiv(dim_out, tn), k_steps)

    x_spec = pl.BlockSpec((tm, tk), lambda i, j, k: (i, k))
    w_spec = pl.BlockSpec((tk, tn), lambda i, j, k: (k, j))   # native (tk, tn) RHS
    o_spec = pl.BlockSpec((tm, tn), lambda i, j, k: (i, j))

    if k_steps == 1:
        kernel = _single_k_kernel          # tk == dim_in here, no mask needed
        scratch = []
    elif jnp.dtype(out_dtype) == jnp.dtype(jnp.float32):
        kernel = functools.partial(
            _multi_k_out_acc_kernel, k_total=dim_in, tk=tk, needs_mask=needs_mask)
        scratch = []
    else:
        kernel = functools.partial(
            _multi_k_scratch_kernel, k_total=dim_in, tk=tk, needs_mask=needs_mask)
        scratch = [pltpu.VMEM((tm, tn), jnp.float32)]

    cost = pl.CostEstimate(
        flops=2 * m * dim_in * dim_out,
        transcendentals=0,
        bytes_accessed=(m * dim_in + dim_in * dim_out) * in_itemsize
        + m * dim_out * out_itemsize,
    )

    out2d = pl.pallas_call(
        kernel,
        out_shape=jax.ShapeDtypeStruct((m, dim_out), out_dtype),
        grid_spec=pltpu.PrefetchScalarGridSpec(
            num_scalar_prefetch=0,
            grid=grid,
            in_specs=[x_spec, w_spec],
            out_specs=o_spec,
            scratch_shapes=scratch,
        ),
        compiler_params=pltpu.CompilerParams(
            dimension_semantics=("parallel", "parallel", "arbitrary"),
            vmem_limit_bytes=vmem_limit,
        ),
        cost_estimate=cost,
    )(x2d, weight_t)

    return out2d.reshape(*orig_shape[:-1], dim_out)


class LinearNoBias:
    """Functional analog of the PyTorch module: y = x @ W^T, no bias.
    Takes the PyTorch-layout (dim_out, dim_in) weight and canonicalizes it once."""

    def __init__(self, weight):
        self.weight_t = jax.block_until_ready(prepare_weight(weight))

    def __call__(self, x, **kw):
        return linear_no_bias(x, self.weight_t, **kw)


# ---------------------------------------------------------------------------
# Self-test
# ---------------------------------------------------------------------------

if __name__ == "__main__":
    key = jax.random.PRNGKey(0)
    k1, k2, k3, k4, k5, k6 = jax.random.split(key, 6)

    # --- Test 1: small shapes, f32, single-K fast path -----------------------
    batch, seq, dim_in, dim_out = 2, 8, 32, 64
    bound = 1.0 / float(dim_in) ** 0.5
    w1 = jax.random.uniform(k1, (dim_out, dim_in), jnp.float32, -bound, bound)
    x1 = jax.random.normal(k2, (batch, seq, dim_in), jnp.float32)

    mod1 = LinearNoBias(w1)
    y1 = jax.block_until_ready(mod1(x1))
    y1_ref = jnp.einsum("bsi,oi->bso", x1, w1)
    assert y1.shape == (batch, seq, dim_out)
    assert jnp.allclose(y1, y1_ref, atol=1e-5, rtol=1e-5)

    # --- Test 2: multi-K with in-kernel K-tail mask (no jnp.pad), f32 output
    #     accumulated directly into the resident output tile ------------------
    dim_in2, dim_out2 = 1280, 256
    bound2 = 1.0 / float(dim_in2) ** 0.5
    w2 = jax.random.uniform(k3, (dim_out2, dim_in2), jnp.float32, -bound2, bound2)
    x2 = jax.random.normal(k4, (batch, seq, dim_in2), jnp.float32)

    mod2 = LinearNoBias(w2)
    y2 = jax.block_until_ready(mod2(x2, tk=512))   # 1280 % 512 != 0 -> mask path
    y2_ref = jnp.einsum(
        "bsi,oi->bso", x2, w2, precision=jax.lax.Precision.HIGHEST
    )
    assert y2.shape == (batch, seq, dim_out2)
    assert jnp.allclose(y2, y2_ref, atol=2e-3, rtol=2e-3)

    # --- Test 3: bf16 output -> f32 scratch accumulator path (multi-K) -------
    dim_in3, dim_out3 = 1024, 256
    bound3 = 1.0 / float(dim_in3) ** 0.5
    w3 = jax.random.uniform(
        k5, (dim_out3, dim_in3), jnp.float32, -bound3, bound3
    ).astype(jnp.bfloat16)
    x3 = jax.random.normal(k6, (batch, seq, dim_in3), jnp.float32).astype(jnp.bfloat16)

    mod3 = LinearNoBias(w3)
    y3 = jax.block_until_ready(mod3(x3, tk=256))   # 4 K steps, exact divisor
    y3_ref = jnp.einsum(
        "bsi,oi->bso",
        x3.astype(jnp.float32),
        w3.astype(jnp.float32),
        precision=jax.lax.Precision.HIGHEST,
    )
    assert y3.shape == (batch, seq, dim_out3)
    assert jnp.allclose(y3.astype(jnp.float32), y3_ref, atol=2e-2, rtol=2e-2)

    print("KERNEL_OK")
</pallas_src>

<mosaic_0001>
module attributes {stable_mosaic.version = 11 : i64} {
  func.func @_single_k_kernel(%arg0: i32, %arg1: i32, %arg2: i32, %arg3: memref<16x32xf32, #tpu.memory_space<vmem>>, %arg4: memref<32x64xf32, #tpu.memory_space<vmem>>, %arg5: memref<16x64xf32, #tpu.memory_space<vmem>>) attributes {dimension_semantics = [#tpu.dimension_semantics<parallel>, #tpu.dimension_semantics<parallel>, #tpu.dimension_semantics<arbitrary>], iteration_bounds = array<i64: 1, 1, 1>, scalar_prefetch = 0 : i64, scratch_operands = 0 : i64, tpu.core_type = #tpu.core_type<tc>, window_params = [{transform_indices = @transform_0, window_bounds = array<i64: 16, 32>}, {transform_indices = @transform_1, window_bounds = array<i64: 32, 64>}, {transform_indices = @transform_2, window_bounds = array<i64: 16, 64>}]} {
    %c0 = arith.constant 0 : index
    %c0_0 = arith.constant 0 : index
    %0 = vector.load %arg3[%c0, %c0_0] : memref<16x32xf32, #tpu.memory_space<vmem>>, vector<16x32xf32>
    %c0_1 = arith.constant 0 : index
    %c0_2 = arith.constant 0 : index
    %1 = vector.load %arg4[%c0_1, %c0_2] : memref<32x64xf32, #tpu.memory_space<vmem>>, vector<32x64xf32>
    %cst = arith.constant dense<0.000000e+00> : vector<16x64xf32>
    %2 = tpu.matmul %0, %1, %cst {dimension_numbers = #tpu.dot_dimension_numbers<[1], [0], [0], [1], [0, 0, 1, 1], [], []>} : vector<16x32xf32>, vector<32x64xf32>, vector<16x64xf32> -> vector<16x64xf32>
    %c0_3 = arith.constant 0 : index
    %c0_4 = arith.constant 0 : index
    %3 = vector.load %arg5[%c0_3, %c0_4] : memref<16x64xf32, #tpu.memory_space<vmem>>, vector<16x64xf32>
    tpu.vector_store %arg5[%c0_3, %c0_4], %2 {strides = array<i32>} : memref<16x64xf32, #tpu.memory_space<vmem>>, vector<16x64xf32>,
    return
  }
  func.func @transform_0(%arg0: i32, %arg1: i32, %arg2: i32) -> (i32, i32) {
    %c0_i32 = arith.constant 0 : i32
    return %arg0, %arg2 : i32, i32
  }
  func.func @transform_1(%arg0: i32, %arg1: i32, %arg2: i32) -> (i32, i32) {
    %c0_i32 = arith.constant 0 : i32
    return %arg2, %arg1 : i32, i32
  }
  func.func @transform_2(%arg0: i32, %arg1: i32, %arg2: i32) -> (i32, i32) {
    %c0_i32 = arith.constant 0 : i32
    return %arg0, %arg1 : i32, i32
  }
}

</mosaic_0001>

<llo_original>
// kernel: tpu_custom_call.1
$region0: #{tpu_custom_call.1}
  #allocation0 [shape = 'u32[]', space=smem, size = 0x4, offset = 0x4, fixed_abs, tag = 'smem constant byte address 0x4 - core index']
  #allocation1 [shape = 'u32[144,128]{1,0:T(1,128)}', space=vmem, size = 0x12000, scoped, tag = 'internal scratch']
  %s0 = inlined_call_operand.hbm [shape: f32[16,32], index: 0, kind: input, shape index: {}]
  %s1 = inlined_call_operand.hbm [shape: f32[32,64], index: 1, kind: input, shape index: {}]
  %s2 = inlined_call_operand.hbm [shape: f32[16,64], index: 2, kind: output, shape index: {}]
  %s3 = sld [smem:[#allocation0]]
  $region26: #{tpu_custom_call.1} parent=0
    _
  %s5 = ssub.s32 1, %s3
  %s6 = scalar_select 0, %s5, %s3
  $region1: #{tpu_custom_call.1} parent=0
    #allocation2 [shape = 'u8[8192]{0}', space=vmem, size = 0x2000, scoped, tag = 'input window, operand 0, single buffered']
    #allocation3 [shape = 's32[1]{0}', space=sflag, size = 0x4, scoped, tag = 'scoped memory for tpu_custom_call.1']
    #allocation4 [shape = 's32[1]{0}', space=sflag, size = 0x4, scoped, tag = 'scoped memory for tpu_custom_call.1']
    #allocation5 [shape = 'u8[16384]{0}', space=vmem, size = 0x4000, scoped, tag = 'input window, operand 1, single buffered']
    #allocation6 [shape = 's32[1]{0}', space=sflag, size = 0x4, scoped, tag = 'scoped memory for tpu_custom_call.1']
    #allocation7 [shape = 'u8[8192]{0}', space=vmem, size = 0x2000, scoped, tag = 'output window, operand 0, single buffered']
    %7 = vsyncpa [#allocation3], 0
    %8 = vsyncpa [#allocation6], 0
    %9 = vsyncpa [#allocation4], 0
    // Predicated region
    $region2: #{tpu_custom_call.1} parent=1 // pred_check
      _
    $region3: #{tpu_custom_call.1} parent=1 // pred_check_branch
      %11 = sbr.rel (0) target = $region5
    $region4: #{tpu_custom_call.1} parent=1 // pred_region
      %s13 = ssub.s32 256, 256
      %14 = vsyncadd [#allocation3], %s13
      %s15 = sshll.u32 [#allocation2], 4
      %s16 = int_to_ptr.vmem [resolvable:$true] %s15
      %21 = dma.hbm_to_vmem [thread:$0]  %s0, 256, %s16, [#allocation3], 128, 128, 8
    $region5: #{tpu_custom_call.1} parent=1 // pred_fallthru
      _
    // Predicated region
    $region6: #{tpu_custom_call.1} parent=1 // pred_check
      _
    $region7: #{tpu_custom_call.1} parent=1 // pred_check_branch
      %23 = sbr.rel (0) target = $region9
    $region8: #{tpu_custom_call.1} parent=1 // pred_region
      %s25 = ssub.s32 512, 512
      %26 = vsyncadd [#allocation6], %s25
      %s27 = sshll.u32 [#allocation5], 4
      %s28 = int_to_ptr.vmem [resolvable:$true] %s27
      %33 = dma.hbm_to_vmem [thread:$0]  %s1, 512, %s28, [#allocation6], 128, 128, 8
    $region9: #{tpu_custom_call.1} parent=1 // pred_fallthru
      _
    // Predicated region
    $region10: #{tpu_custom_call.1} parent=1 // pred_check
      _
    $region11: #{tpu_custom_call.1} parent=1 // pred_check_branch
      %35 = sbr.rel (0) target = $region13
    $region12: #{tpu_custom_call.1} parent=1 // pred_region
      %36 = dma.done [#allocation3], 256
    $region13: #{tpu_custom_call.1} parent=1 // pred_fallthru
      _
    // Predicated region
    $region14: #{tpu_custom_call.1} parent=1 // pred_check
      _
    $region15: #{tpu_custom_call.1} parent=1 // pred_check_branch
      %38 = sbr.rel (0) target = $region17
    $region16: #{tpu_custom_call.1} parent=1 // pred_region
      %39 = dma.done [#allocation6], 512
    $region17: #{tpu_custom_call.1} parent=1 // pred_fallthru
      _
    %v40 = vld [vmem:[#allocation2] sm:$0xff]
    %v41 = vld [vmem:[#allocation2 + $0x8] sm:$0xff]
    %v42 = vld [vmem:[#allocation5] sm:$0xff]
    %v43 = vld [vmem:[#allocation5 + $0x8] sm:$0xff]
    %v44 = vld [vmem:[#allocation5 + $0x10] sm:$0xff]
    %v45 = vld [vmem:[#allocation5 + $0x18] sm:$0xff]
    %vm46 = vcmask 261120
    %v48 = vsel %vm46, %v40, 0
    %v51 = vsel %vm46, %v41, 0
    %53 = vmatprep.subr.mxu0 0.0
    %54 = vmatpush1.msra.mxu0 %v42
    %55 = vmatprep.subr.mxu0 0.0
    %56 = vmatpush1.msra.mxu0 %v43
    %57 = vmatprep.subr.mxu0 0.0
    %58 = vmatpush1.msra.mxu0 %v44
    %59 = vmatprep.subr.mxu0 0.0
    %60 = vmatpush1.msra.mxu0 %v45
    %61 = vmatprep.subr.mxu0 0.0
    %62 = vmatpush1.msra.mxu0 0.0
    %63 = vmatprep.subr.mxu0 0.0
    %64 = vmatpush1.msra.mxu0 0.0
    %65 = vmatprep.subr.mxu0 0.0
    %66 = vmatpush1.msra.mxu0 0.0
    %67 = vmatprep.subr.mxu0 0.0
    %68 = vmatpush1.msra.mxu0 0.0
    %69 = vmatprep.subr.mxu0 0.0
    %70 = vmatpush1.msra.mxu0 0.0
    %71 = vmatprep.subr.mxu0 0.0
    %72 = vmatpush1.msra.mxu0 0.0
    %73 = vmatprep.subr.mxu0 0.0
    %74 = vmatpush1.msra.mxu0 0.0
    %75 = vmatprep.subr.mxu0 0.0
    %76 = vmatpush1.msra.mxu0 0.0
    %77 = vmatprep.subr.mxu0 0.0
    %78 = vmatpush1.msra.mxu0 0.0
    %79 = vmatprep.subr.mxu0 0.0
    %80 = vmatpush1.msra.mxu0 0.0
    %81 = vmatprep.subr.mxu0 0.0
    %82 = vmatpush1.msra.mxu0 0.0
    %83 = vmatprep.subr.mxu0 0.0
    %84 = vmatpush1.msra.mxu0 0.0
    %85 = vmatprep.subr.mxu0 0.0
    %86 = vmatpush1.msra.mxu0 0.0
    %87 = vmatprep.subr.mxu0 0.0
    %88 = vmatpush1.msra.mxu0 0.0
    %89 = vmatprep.subr.mxu0 0.0
    %90 = vmatpush1.msra.mxu0 0.0
    %91 = vmatprep.subr.mxu0 0.0
    %92 = vmatpush1.msra.mxu0 0.0
    %93 = vmatprep.subr.mxu0 0.0
    %94 = vmatpush1.msra.mxu0 0.0
    %95 = vmatprep.subr.mxu0 0.0
    %96 = vmatpush1.msra.mxu0 0.0
    %97 = vmatprep.subr.mxu0 0.0
    %98 = vmatpush1.msra.mxu0 0.0
    %99 = vmatprep.subr.mxu0 0.0
    %100 = vmatpush1.msra.mxu0 0.0
    %101 = vmatprep.subr.mxu0 0.0
    %102 = vmatpush1.msra.mxu0 0.0
    %103 = vmatprep.subr.mxu0 0.0
    %104 = vmatpush1.msra.mxu0 0.0
    %105 = vmatprep.subr.mxu0 0.0
    %106 = vmatpush1.msra.mxu0 0.0
    %107 = vmatprep.subr.mxu0 0.0
    %108 = vmatpush1.msra.mxu0 0.0
    %109 = vmatprep.subr.mxu0 0.0
    %110 = vmatpush1.msra.mxu0 0.0
    %111 = vmatprep.subr.mxu0 0.0
    %112 = vmatpush1.msra.mxu0 0.0
    %113 = vmatprep.subr.mxu0 0.0
    %114 = vmatpush1.msra.mxu0 0.0
    %115 = vmatprep.subr.mxu0 0.0
    %116 = vmatpush1.msra.mxu0 0.0
    %117 = vmatprep.mubr.f32.mxu0 0.0
    %118 = vmatmul.mubr.f32.gmra.mrb[0].mxu0 %v48
    %v119 = vpop.f32.mrb[0].mxu0
    %v120 = vadd.f32 0.0, %v119
    %v121 = vpop.f32.mrb[0].mxu0
    %122 = vmatprep.mubr.f32.mxu0 0.0
    %123 = vmatmul.mubr.f32.gmra.mrb[0].mxu0 %v51
    %v124 = vpop.f32.mrb[0].mxu0
    %v125 = vadd.f32 0.0, %v124
    %v126 = vpop.f32.mrb[0].mxu0
    %127 = vdwg.mxu0
    %vm128 = vcmask 523264
    %129 = vst.msk [vmem:[#allocation7] sm:$0xff] %vm128, %v120
    %130 = vst.msk [vmem:[#allocation7 + $0x8] sm:$0xff] %vm128, %v125
    // Predicated region
    $region18: #{tpu_custom_call.1} parent=1 // pred_check
      _
    $region19: #{tpu_custom_call.1} parent=1 // pred_check_branch
      %132 = sbr.rel (0) target = $region21
    $region20: #{tpu_custom_call.1} parent=1 // pred_region
      %s134 = ssub.s32 256, 256
      %135 = vsyncadd [#allocation4], %s134
      %s136 = sshll.u32 [#allocation7], 4
      %s137 = int_to_ptr.vmem [resolvable:$true] %s136
      %142 = dma.vmem_to_hbm [thread:$0]  %s137, 256, %s2, [#allocation4], 128, 128, 8
    $region21: #{tpu_custom_call.1} parent=1 // pred_fallthru
      _
    // Predicated region
    $region22: #{tpu_custom_call.1} parent=1 // pred_check
      _
    $region23: #{tpu_custom_call.1} parent=1 // pred_check_branch
      %144 = sbr.rel (0) target = $region25
    $region24: #{tpu_custom_call.1} parent=1 // pred_region
      %145 = dma.done [#allocation4], 256
    $region25: #{tpu_custom_call.1} parent=1 // pred_fallthru
      _
    %146 = vsyncpa [#allocation3], 1
    %147 = vsyncpa [#allocation6], 1
    %148 = vsyncpa [#allocation4], 1

</llo_original>
